<compile_context>
chip_gen: v6e
topology: v6e:2x2x1
jax: 0.10.0
libtpu: 0.0.40
codegen_flags: <defaults>
</compile_context>

<pallas_src>
import functools

import jax
import jax.numpy as jnp
from jax import lax
from jax.experimental import pallas as pl
from jax.experimental.pallas import tpu as pltpu


def _round_up(x, m):
    return (x + m - 1) // m * m


# --------------------------------------------------------------------------- #
# Kernel
# --------------------------------------------------------------------------- #
def actor_kernel(x_ref, w0_ref, w1_ref, w2_ref, b0_ref, b1_ref, b2_ref,
                 out_ref, *, max_action):
    """Fused 3-layer MLP forward for one batch tile.

    Matmuls take bf16 inputs and accumulate in f32 on the MXU; bias-add,
    ReLU, tanh and the max_action scale stay in f32 (portable to v5e).
    """
    x = x_ref[...]                                   # (TB, state_dim)

    # Layer 0: Linear + ReLU
    h = jnp.dot(x, w0_ref[...], preferred_element_type=jnp.float32)
    h = jnp.maximum(h + b0_ref[...], 0.0)

    # Layer 1: Linear + ReLU
    h = jnp.dot(h.astype(w1_ref.dtype), w1_ref[...],
                preferred_element_type=jnp.float32)
    h = jnp.maximum(h + b1_ref[...], 0.0)

    # Layer 2: Linear + tanh, scaled by max_action
    y = jnp.dot(h.astype(w2_ref.dtype), w2_ref[...],
                preferred_element_type=jnp.float32)
    y = y + b2_ref[...]
    out_ref[...] = (max_action * jnp.tanh(y)).astype(out_ref.dtype)


# --------------------------------------------------------------------------- #
# Wrapper
# --------------------------------------------------------------------------- #
def _pick_batch_tile(b8, *, max_tile=4096, min_steps=2):
    """Big tiles amortize per-step pipeline overhead (~0.35us); keep at least
    `min_steps` grid steps on large batches so v7x's two TensorCores can
    split the 'parallel' batch axis."""
    tb = min(max_tile, _round_up(pl.cdiv(b8, min_steps), 8))
    return max(tb, 8)


def actor_forward(state, prepared, max_action, *, max_block_b=4096,
                  min_grid_steps=2):
    """state: [B, state_dim] float32.  prepared: output of prepare_actor_params."""
    state_dim, h0, h1, action_dim = prepared["dims"]
    w0, w1, w2 = prepared["w0"], prepared["w1"], prepared["w2"]
    b0, b1, b2 = prepared["b0"], prepared["b1"], prepared["b2"]
    h0p, h1p, adp = w0.shape[1], w1.shape[1], w2.shape[1]

    B = state.shape[0]
    assert state.shape[1] == state_dim

    # bf16 halves HBM bytes of the only streamed operand; MXU accumulates f32.
    x = state.astype(w0.dtype)

    b8 = _round_up(B, 8)
    tb = _pick_batch_tile(b8, max_tile=max_block_b, min_steps=min_grid_steps)
    b_pad = _round_up(B, tb)
    if b_pad != B:                 # only ragged batches pay the pad copy
        x = jnp.pad(x, ((0, b_pad - B), (0, 0)))

    kernel = functools.partial(actor_kernel, max_action=float(max_action))

    flops = 2 * B * (state_dim * h0 + h0 * h1 + h1 * action_dim)
    bytes_accessed = (B * state_dim * x.dtype.itemsize
                      + B * action_dim * 4
                      + sum(int(a.size) * a.dtype.itemsize
                            for a in (w0, w1, w2, b0, b1, b2)))
    cost = pl.CostEstimate(flops=flops,
                           transcendentals=B * action_dim,
                           bytes_accessed=bytes_accessed)

    out = pl.pallas_call(
        kernel,
        out_shape=jax.ShapeDtypeStruct((b_pad, adp), jnp.float32),
        grid=(b_pad // tb,),
        in_specs=[
            # Activations: streamed / pipelined over the batch grid.
            pl.BlockSpec((tb, state_dim), lambda i: (i, 0)),
            # Weights + biases: constant block index -> fetched once,
            # VMEM-resident across all grid steps.
            pl.BlockSpec((state_dim, h0p), lambda i: (0, 0)),
            pl.BlockSpec((h0p, h1p), lambda i: (0, 0)),
            pl.BlockSpec((h1p, adp), lambda i: (0, 0)),
            pl.BlockSpec((1, h0p), lambda i: (0, 0)),
            pl.BlockSpec((1, h1p), lambda i: (0, 0)),
            pl.BlockSpec((1, adp), lambda i: (0, 0)),
        ],
        out_specs=pl.BlockSpec((tb, adp), lambda i: (i, 0)),
        compiler_params=pltpu.CompilerParams(
            dimension_semantics=("parallel",)),
        cost_estimate=cost,
    )(x, w0, w1, w2, b0, b1, b2)

    return out[:B, :action_dim]


# --------------------------------------------------------------------------- #
# Parameter construction / preparation (out of the hot path)
# --------------------------------------------------------------------------- #
def init_actor_params(key, state_dim, action_dim, hidden_dim):
    """Deterministic init mimicking nn.Linear's U(-1/sqrt(fan_in), 1/sqrt(fan_in))."""
    dims = [state_dim] + list(hidden_dim) + [action_dim]
    params = {}
    for i, (fan_in, fan_out) in enumerate(zip(dims[:-1], dims[1:])):
        key, kw, kb = jax.random.split(key, 3)
        bound = 1.0 / jnp.sqrt(float(fan_in))
        # Stored [in, out] so the kernel does x @ W.
        w = jax.random.uniform(kw, (fan_in, fan_out), jnp.float32, -bound, bound)
        b = jax.random.uniform(kb, (1, fan_out), jnp.float32, -bound, bound)
        params[f"fc{i}"] = (w, b)
    return params


def prepare_actor_params(params, *, compute_dtype=jnp.bfloat16):
    """One-time packing: zero-pad every output-feature dim up to a multiple of
    128 lanes (lane-dense matmuls / bias-adds / stores) and cast weights to
    the matmul input dtype.  Biases stay f32 (f32 elementwise everywhere)."""
    (w0, b0), (w1, b1), (w2, b2) = params["fc0"], params["fc1"], params["fc2"]
    state_dim, h0 = w0.shape
    h1 = w1.shape[1]
    action_dim = w2.shape[1]
    h0p, h1p, adp = (_round_up(d, 128) for d in (h0, h1, action_dim))

    def pad_w(w, rows, cols):
        return jnp.pad(w, ((0, rows - w.shape[0]), (0, cols - w.shape[1])))

    def pad_b(b, cols):
        return jnp.pad(b, ((0, 0), (0, cols - b.shape[1])))

    return {
        "w0": pad_w(w0, state_dim, h0p).astype(compute_dtype),
        "w1": pad_w(w1, h0p, h1p).astype(compute_dtype),
        "w2": pad_w(w2, h1p, adp).astype(compute_dtype),
        "b0": pad_b(b0, h0p).astype(jnp.float32),
        "b1": pad_b(b1, h1p).astype(jnp.float32),
        "b2": pad_b(b2, adp).astype(jnp.float32),
        "dims": (state_dim, h0, h1, action_dim),
    }


# --------------------------------------------------------------------------- #
# References
# --------------------------------------------------------------------------- #
def actor_ref(state, params, max_action, *, compute_dtype=jnp.float32):
    """Pure-JAX reference. With compute_dtype=bf16 it mirrors the kernel's
    matmul rounding (bf16 inputs, f32 accumulation) for a tight check."""
    (w0, b0), (w1, b1), (w2, b2) = params["fc0"], params["fc1"], params["fc2"]

    def dense(a, w, b):
        a = a.astype(compute_dtype).astype(jnp.float32)
        w = w.astype(compute_dtype).astype(jnp.float32)
        return jnp.dot(a, w, precision=lax.Precision.HIGHEST) + b

    a = jnp.maximum(dense(state, w0, b0), 0.0)
    a = jnp.maximum(dense(a, w1, b1), 0.0)
    return max_action * jnp.tanh(dense(a, w2, b2))


# --------------------------------------------------------------------------- #
# Self-test
# --------------------------------------------------------------------------- #
if __name__ == "__main__":
    key = jax.random.PRNGKey(0)
    k_param, k1, k2, k3 = jax.random.split(key, 4)

    state_dim = 16
    action_dim = 8
    hidden_dim = [32, 32]
    max_action = 2.0

    params = init_actor_params(k_param, state_dim, action_dim, hidden_dim)
    prepared = prepare_actor_params(params)   # hoisted out of the hot path

    # B=8: single tile; B=20: ragged batch (padding path); B=512: multi-step
    # grid (exercises the >=2-step cap used for v7x megacore splitting).
    for k, B in ((k1, 8), (k2, 20), (k3, 512)):
        state = jax.random.normal(k, (B, state_dim), jnp.float32)
        out = jax.block_until_ready(actor_forward(state, prepared, max_action))
        assert out.shape == (B, action_dim)

        # Tight check vs a reference mirroring the kernel's bf16 matmul math.
        ref_bf16 = actor_ref(state, params, max_action,
                             compute_dtype=jnp.bfloat16)
        assert jnp.allclose(out, ref_bf16, atol=1e-2, rtol=1e-2), \
            f"mismatch vs bf16-mirror reference (B={B})"

        # Loose check vs the exact f32 PyTorch-equivalent forward.
        ref_f32 = actor_ref(state, params, max_action)
        assert jnp.allclose(out, ref_f32, atol=5e-2, rtol=5e-2), \
            f"drift vs f32 reference (B={B})"

    print("KERNEL_OK")
</pallas_src>

<mosaic_0001>
module attributes {stable_mosaic.version = 11 : i64} {
  func.func @actor_kernel(%arg0: i32, %arg1: memref<8x16xbf16, #tpu.memory_space<vmem>>, %arg2: memref<16x128xbf16, #tpu.memory_space<vmem>>, %arg3: memref<128x128xbf16, #tpu.memory_space<vmem>>, %arg4: memref<128x128xbf16, #tpu.memory_space<vmem>>, %arg5: memref<1x128xf32, #tpu.memory_space<vmem>>, %arg6: memref<1x128xf32, #tpu.memory_space<vmem>>, %arg7: memref<1x128xf32, #tpu.memory_space<vmem>>, %arg8: memref<8x128xf32, #tpu.memory_space<vmem>>) attributes {dimension_semantics = [#tpu.dimension_semantics<parallel>], iteration_bounds = array<i64: 1>, scalar_prefetch = 0 : i64, scratch_operands = 0 : i64, tpu.core_type = #tpu.core_type<tc>, window_params = [{transform_indices = @transform_0, window_bounds = array<i64: 8, 16>}, {pipeline_mode = #tpu.pipeline_mode<synchronous>, transform_indices = @transform_1, window_bounds = array<i64: 16, 128>}, {pipeline_mode = #tpu.pipeline_mode<synchronous>, transform_indices = @transform_2, window_bounds = array<i64: 128, 128>}, {pipeline_mode = #tpu.pipeline_mode<synchronous>, transform_indices = @transform_3, window_bounds = array<i64: 128, 128>}, {pipeline_mode = #tpu.pipeline_mode<synchronous>, transform_indices = @transform_4, window_bounds = array<i64: 1, 128>}, {pipeline_mode = #tpu.pipeline_mode<synchronous>, transform_indices = @transform_5, window_bounds = array<i64: 1, 128>}, {pipeline_mode = #tpu.pipeline_mode<synchronous>, transform_indices = @transform_6, window_bounds = array<i64: 1, 128>}, {transform_indices = @transform_7, window_bounds = array<i64: 8, 128>}]} {
    %c0 = arith.constant 0 : index
    %c0_0 = arith.constant 0 : index
    %0 = vector.load %arg1[%c0, %c0_0] : memref<8x16xbf16, #tpu.memory_space<vmem>>, vector<8x16xbf16>
    %c0_1 = arith.constant 0 : index
    %c0_2 = arith.constant 0 : index
    %1 = vector.load %arg2[%c0_1, %c0_2] : memref<16x128xbf16, #tpu.memory_space<vmem>>, vector<16x128xbf16>
    %cst = arith.constant dense<0.000000e+00> : vector<8x128xf32>
    %2 = tpu.matmul %0, %1, %cst {dimension_numbers = #tpu.dot_dimension_numbers<[1], [0], [0], [1], [0, 0, 1, 1], [], []>} : vector<8x16xbf16>, vector<16x128xbf16>, vector<8x128xf32> -> vector<8x128xf32>
    %c0_3 = arith.constant 0 : index
    %c0_4 = arith.constant 0 : index
    %3 = vector.load %arg5[%c0_3, %c0_4] : memref<1x128xf32, #tpu.memory_space<vmem>>, vector<1x128xf32>
    %4 = vector.broadcast %3 : vector<1x128xf32> to vector<8x128xf32>
    %5 = arith.addf %2, %4 : vector<8x128xf32>
    %cst_5 = arith.constant 0.000000e+00 : f32
    %6 = vector.broadcast %cst_5 : f32 to vector<8x128xf32>
    %7 = arith.maximumf %5, %6 : vector<8x128xf32>
    %8 = arith.truncf %7 : vector<8x128xf32> to vector<8x128xbf16>
    %c0_6 = arith.constant 0 : index
    %c0_7 = arith.constant 0 : index
    %9 = vector.load %arg3[%c0_6, %c0_7] : memref<128x128xbf16, #tpu.memory_space<vmem>>, vector<128x128xbf16>
    %cst_8 = arith.constant dense<0.000000e+00> : vector<8x128xf32>
    %10 = tpu.matmul %8, %9, %cst_8 {dimension_numbers = #tpu.dot_dimension_numbers<[1], [0], [0], [1], [0, 0, 1, 1], [], []>} : vector<8x128xbf16>, vector<128x128xbf16>, vector<8x128xf32> -> vector<8x128xf32>
    %c0_9 = arith.constant 0 : index
    %c0_10 = arith.constant 0 : index
    %11 = vector.load %arg6[%c0_9, %c0_10] : memref<1x128xf32, #tpu.memory_space<vmem>>, vector<1x128xf32>
    %12 = vector.broadcast %11 : vector<1x128xf32> to vector<8x128xf32>
    %13 = arith.addf %10, %12 : vector<8x128xf32>
    %cst_11 = arith.constant 0.000000e+00 : f32
    %14 = vector.broadcast %cst_11 : f32 to vector<8x128xf32>
    %15 = arith.maximumf %13, %14 : vector<8x128xf32>
    %16 = arith.truncf %15 : vector<8x128xf32> to vector<8x128xbf16>
    %c0_12 = arith.constant 0 : index
    %c0_13 = arith.constant 0 : index
    %17 = vector.load %arg4[%c0_12, %c0_13] : memref<128x128xbf16, #tpu.memory_space<vmem>>, vector<128x128xbf16>
    %cst_14 = arith.constant dense<0.000000e+00> : vector<8x128xf32>
    %18 = tpu.matmul %16, %17, %cst_14 {dimension_numbers = #tpu.dot_dimension_numbers<[1], [0], [0], [1], [0, 0, 1, 1], [], []>} : vector<8x128xbf16>, vector<128x128xbf16>, vector<8x128xf32> -> vector<8x128xf32>
    %c0_15 = arith.constant 0 : index
    %c0_16 = arith.constant 0 : index
    %19 = vector.load %arg7[%c0_15, %c0_16] : memref<1x128xf32, #tpu.memory_space<vmem>>, vector<1x128xf32>
    %20 = vector.broadcast %19 : vector<1x128xf32> to vector<8x128xf32>
    %21 = arith.addf %18, %20 : vector<8x128xf32>
    %22 = math.tanh %21 : vector<8x128xf32>
    %cst_17 = arith.constant 2.000000e+00 : f32
    %23 = vector.broadcast %cst_17 : f32 to vector<8x128xf32>
    %24 = arith.mulf %23, %22 : vector<8x128xf32>
    %c0_18 = arith.constant 0 : index
    %c0_19 = arith.constant 0 : index
    %25 = vector.load %arg8[%c0_18, %c0_19] : memref<8x128xf32, #tpu.memory_space<vmem>>, vector<8x128xf32>
    tpu.vector_store %arg8[%c0_18, %c0_19], %24 {strides = array<i32>} : memref<8x128xf32, #tpu.memory_space<vmem>>, vector<8x128xf32>,
    return
  }
  func.func @transform_0(%arg0: i32) -> (i32, i32) {
    %c0_i32 = arith.constant 0 : i32
    %c0_i32_0 = arith.constant 0 : i32
    return %arg0, %c0_i32 : i32, i32
  }
  func.func @transform_1(%arg0: i32) -> (i32, i32) {
    %c0_i32 = arith.constant 0 : i32
    %c0_i32_0 = arith.constant 0 : i32
    %c0_i32_1 = arith.constant 0 : i32
    return %c0_i32, %c0_i32_0 : i32, i32
  }
  func.func @transform_2(%arg0: i32) -> (i32, i32) {
    %c0_i32 = arith.constant 0 : i32
    %c0_i32_0 = arith.constant 0 : i32
    %c0_i32_1 = arith.constant 0 : i32
    return %c0_i32, %c0_i32_0 : i32, i32
  }
  func.func @transform_3(%arg0: i32) -> (i32, i32) {
    %c0_i32 = arith.constant 0 : i32
    %c0_i32_0 = arith.constant 0 : i32
    %c0_i32_1 = arith.constant 0 : i32
    return %c0_i32, %c0_i32_0 : i32, i32
  }
  func.func @transform_4(%arg0: i32) -> (i32, i32) {
    %c0_i32 = arith.constant 0 : i32
    %c0_i32_0 = arith.constant 0 : i32
    %c0_i32_1 = arith.constant 0 : i32
    return %c0_i32, %c0_i32_0 : i32, i32
  }
  func.func @transform_5(%arg0: i32) -> (i32, i32) {
    %c0_i32 = arith.constant 0 : i32
    %c0_i32_0 = arith.constant 0 : i32
    %c0_i32_1 = arith.constant 0 : i32
    return %c0_i32, %c0_i32_0 : i32, i32
  }
  func.func @transform_6(%arg0: i32) -> (i32, i32) {
    %c0_i32 = arith.constant 0 : i32
    %c0_i32_0 = arith.constant 0 : i32
    %c0_i32_1 = arith.constant 0 : i32
    return %c0_i32, %c0_i32_0 : i32, i32
  }
  func.func @transform_7(%arg0: i32) -> (i32, i32) {
    %c0_i32 = arith.constant 0 : i32
    %c0_i32_0 = arith.constant 0 : i32
    return %arg0, %c0_i32 : i32, i32
  }
}

</mosaic_0001>

<llo_original>
// kernel: tpu_custom_call.1
$region0: #{tpu_custom_call.1}
  #allocation0 [shape = 'u32[]', space=smem, size = 0x4, offset = 0x4, fixed_abs, tag = 'smem constant byte address 0x4 - core index']
  #allocation1 [shape = 'u32[144,128]{1,0:T(1,128)}', space=vmem, size = 0x12000, scoped, tag = 'internal scratch']
  %s0 = inlined_call_operand.hbm [shape: bf16[8,16], index: 0, kind: input, shape index: {}]
  %s1 = inlined_call_operand.hbm [shape: bf16[16,128], index: 1, kind: input, shape index: {}]
  %s2 = inlined_call_operand.hbm [shape: bf16[128,128], index: 2, kind: input, shape index: {}]
  %s3 = inlined_call_operand.hbm [shape: bf16[128,128], index: 3, kind: input, shape index: {}]
  %s4 = inlined_call_operand.vmem [shape: f32[1,128], index: 4, kind: input, shape index: {}]
  %s5 = inlined_call_operand.vmem [shape: f32[1,128], index: 5, kind: input, shape index: {}]
  %s6 = inlined_call_operand.vmem [shape: f32[1,128], index: 6, kind: input, shape index: {}]
  %s7 = inlined_call_operand.hbm [shape: f32[8,128], index: 7, kind: output, shape index: {}]
  %s8 = sld [smem:[#allocation0]]
  $region54: #{tpu_custom_call.1} parent=0
    _
  %s10 = ssub.s32 1, %s8
  %s11 = scalar_select 0, %s10, %s8
  $region1: #{tpu_custom_call.1} parent=0
    #allocation2 [shape = 'u8[2048]{0}', space=vmem, size = 0x800, scoped, tag = 'input window, operand 0, single buffered']
    #allocation3 [shape = 's32[1]{0}', space=sflag, size = 0x4, scoped, tag = 'scoped memory for tpu_custom_call.1']
    #allocation4 [shape = 's32[1]{0}', space=sflag, size = 0x4, scoped, tag = 'scoped memory for tpu_custom_call.1']
    #allocation5 [shape = 'u8[4096]{0}', space=vmem, size = 0x1000, scoped, tag = 'input window, operand 1, single buffered']
    #allocation6 [shape = 's32[1]{0}', space=sflag, size = 0x4, scoped, tag = 'scoped memory for tpu_custom_call.1']
    #allocation7 [shape = 'u8[32768]{0}', space=vmem, size = 0x8000, scoped, tag = 'input window, operand 2, single buffered']
    #allocation8 [shape = 'u8[32768]{0}', space=vmem, size = 0x8000, scoped, tag = 'input window, operand 3, single buffered']
    #allocation9 [shape = 's32[1]{0}', space=sflag, size = 0x4, scoped, tag = 'scoped memory for tpu_custom_call.1']
    #allocation10 [shape = 'u8[4096]{0}', space=vmem, size = 0x1000, scoped, tag = 'output window, operand 0, single buffered']
    %12 = vsyncpa [#allocation3], 0
    %13 = vsyncpa [#allocation6], 0
    %14 = vsyncpa [#allocation9], 0
    %15 = vsyncpa [#allocation4], 0
    // Predicated region
    $region2: #{tpu_custom_call.1} parent=1 // pred_check
      _
    $region3: #{tpu_custom_call.1} parent=1 // pred_check_branch
      %17 = sbr.rel (0) target = $region5
    $region4: #{tpu_custom_call.1} parent=1 // pred_region
      %s19 = ssub.s32 64, 64
      %20 = vsyncadd [#allocation3], %s19
      %s22 = sshll.u32 [#allocation2], 4
      %s23 = int_to_ptr.vmem [resolvable:$true] %s22
      %25 = dma.hbm_to_vmem [thread:$0]  %s0, 64, %s23, [#allocation3]
    $region5: #{tpu_custom_call.1} parent=1 // pred_fallthru
      _
    // Predicated region
    $region6: #{tpu_custom_call.1} parent=1 // pred_check
      _
    $region7: #{tpu_custom_call.1} parent=1 // pred_check_branch
      %27 = sbr.rel (0) target = $region9
    $region8: #{tpu_custom_call.1} parent=1 // pred_region
      %s29 = ssub.s32 128, 128
      %30 = vsyncadd [#allocation6], %s29
      %s31 = sshll.u32 [#allocation5], 4
      %s32 = int_to_ptr.vmem [resolvable:$true] %s31
      %37 = dma.hbm_to_vmem [thread:$0]  %s1, 128, %s32, [#allocation6], 64, 64, 4
    $region9: #{tpu_custom_call.1} parent=1 // pred_fallthru
      _
    // Predicated region
    $region10: #{tpu_custom_call.1} parent=1 // pred_check
      _
    $region11: #{tpu_custom_call.1} parent=1 // pred_check_branch
      %39 = sbr.rel (0) target = $region13
    $region12: #{tpu_custom_call.1} parent=1 // pred_region
      %s41 = ssub.s32 1024, 1024
      %42 = vsyncadd [#allocation6], %s41
      %s43 = sshll.u32 [#allocation7], 4
      %s44 = int_to_ptr.vmem [resolvable:$true] %s43
      %49 = dma.hbm_to_vmem [thread:$0]  %s2, 1024, %s44, [#allocation6], 64, 64, 4
    $region13: #{tpu_custom_call.1} parent=1 // pred_fallthru
      _
    // Predicated region
    $region14: #{tpu_custom_call.1} parent=1 // pred_check
      _
    $region15: #{tpu_custom_call.1} parent=1 // pred_check_branch
      %51 = sbr.rel (0) target = $region17
    $region16: #{tpu_custom_call.1} parent=1 // pred_region
      %s53 = ssub.s32 1024, 1024
      %54 = vsyncadd [#allocation9], %s53
      %s55 = sshll.u32 [#allocation8], 4
      %s56 = int_to_ptr.vmem [resolvable:$true] %s55
      %61 = dma.hbm_to_vmem [thread:$0]  %s3, 1024, %s56, [#allocation9], 64, 64, 4
    $region17: #{tpu_custom_call.1} parent=1 // pred_fallthru
      _
    // Predicated region
    $region18: #{tpu_custom_call.1} parent=1 // pred_check
      _
    $region19: #{tpu_custom_call.1} parent=1 // pred_check_branch
      %63 = sbr.rel (0) target = $region21
    $region20: #{tpu_custom_call.1} parent=1 // pred_region
      _
    $region21: #{tpu_custom_call.1} parent=1 // pred_fallthru
      _
    // Predicated region
    $region22: #{tpu_custom_call.1} parent=1 // pred_check
      _
    $region23: #{tpu_custom_call.1} parent=1 // pred_check_branch
      %65 = sbr.rel (0) target = $region25
    $region24: #{tpu_custom_call.1} parent=1 // pred_region
      _
    $region25: #{tpu_custom_call.1} parent=1 // pred_fallthru
      _
    // Predicated region
    $region26: #{tpu_custom_call.1} parent=1 // pred_check
      _
    $region27: #{tpu_custom_call.1} parent=1 // pred_check_branch
      %67 = sbr.rel (0) target = $region29
    $region28: #{tpu_custom_call.1} parent=1 // pred_region
      _
    $region29: #{tpu_custom_call.1} parent=1 // pred_fallthru
      _
    // Predicated region
    $region30: #{tpu_custom_call.1} parent=1 // pred_check
      _
    $region31: #{tpu_custom_call.1} parent=1 // pred_check_branch
      %69 = sbr.rel (0) target = $region33
    $region32: #{tpu_custom_call.1} parent=1 // pred_region
      %70 = dma.done [#allocation3], 64
    $region33: #{tpu_custom_call.1} parent=1 // pred_fallthru
      _
    // Predicated region
    $region34: #{tpu_custom_call.1} parent=1 // pred_check
      _
    $region35: #{tpu_custom_call.1} parent=1 // pred_check_branch
      %72 = sbr.rel (0) target = $region37
    $region36: #{tpu_custom_call.1} parent=1 // pred_region
      %73 = dma.done [#allocation6], 128
    $region37: #{tpu_custom_call.1} parent=1 // pred_fallthru
      _
    // Predicated region
    $region38: #{tpu_custom_call.1} parent=1 // pred_check
      _
    $region39: #{tpu_custom_call.1} parent=1 // pred_check_branch
      %75 = sbr.rel (0) target = $region41
    $region40: #{tpu_custom_call.1} parent=1 // pred_region
      %76 = dma.done [#allocation6], 1024
    $region41: #{tpu_custom_call.1} parent=1 // pred_fallthru
      _
    // Predicated region
    $region42: #{tpu_custom_call.1} parent=1 // pred_check
      _
    $region43: #{tpu_custom_call.1} parent=1 // pred_check_branch
      %78 = sbr.rel (0) target = $region45
    $region44: #{tpu_custom_call.1} parent=1 // pred_region
      %79 = dma.done [#allocation9], 1024
    $region45: #{tpu_custom_call.1} parent=1 // pred_fallthru
      _
    %v81 = vld [vmem:[#allocation2] sm:$0xf]
    %v82 = vld [vmem:[#allocation5] sm:$0xf]
    %v83 = vld [vmem:[#allocation5 + $0x4] sm:$0xf]
    %v84 = vld [vmem:[%s4] sm:$0x1]
    %v86 = vlaneseq
    %v87 = vshrl.u32 %v86, 7
    %v88 = vsub.s32 0, %v87
    %v89 = vrot.slane %v84, %v88
    %v93 = vunpack.c.l.b16 %v82
    %v94 = vunpack.c.l.b16 %v83
    %v95 = vpack.c.b16 %v94, %v93
    %vm97 = vcmask 130048
    %v99 = vsel %vm97, %v81, 0
    %101 = vmatprep.subr.bf16.mxu0 0
    %102 = vmatpush1.bf16.msra.mxu0 0
    %103 = vmatprep.subr.bf16.mxu0 0
    %104 = vmatpush1.bf16.msra.mxu0 0
    %105 = vmatprep.subr.bf16.mxu0 0
    %106 = vmatpush1.bf16.msra.mxu0 0
    %107 = vmatprep.subr.bf16.mxu0 0
    %108 = vmatpush1.bf16.msra.mxu0 0
    %109 = vmatprep.subr.bf16.mxu0 0
    %110 = vmatpush1.bf16.msra.mxu0 0
    %111 = vmatprep.subr.bf16.mxu0 0
    %112 = vmatpush1.bf16.msra.mxu0 0
    %113 = vmatprep.subr.bf16.mxu0 0
    %114 = vmatpush1.bf16.msra.mxu0 0
    %115 = vmatprep.subr.bf16.mxu0 0
    %116 = vmatpush1.bf16.msra.mxu0 %v95
    %117 = vmatprep.subr.bf16.mxu0 0
    %118 = vmatpush2.bf16.msra.mxu0 0
    %119 = vmatprep.subr.bf16.mxu0 0
    %120 = vmatpush2.bf16.msra.mxu0 0
    %121 = vmatprep.subr.bf16.mxu0 0
    %122 = vmatpush2.bf16.msra.mxu0 0
    %123 = vmatprep.subr.bf16.mxu0 0
    %124 = vmatpush2.bf16.msra.mxu0 0
    %125 = vmatprep.subr.bf16.mxu0 0
    %126 = vmatpush2.bf16.msra.mxu0 0
    %127 = vmatprep.subr.bf16.mxu0 0
    %128 = vmatpush2.bf16.msra.mxu0 0
    %129 = vmatprep.subr.bf16.mxu0 0
    %130 = vmatpush2.bf16.msra.mxu0 0
    %131 = vmatprep.subr.bf16.mxu0 0
    %132 = vmatpush2.bf16.msra.mxu0 0
    %133 = vmatprep.mubr.bf16.mxu0 0
    %134 = vmatmul.mubr.bf16.gmra.mxu0 %v99
    %v135 = vpop.f32.mrf.mxu0
    %v136 = vadd.f32 %v89, %v135
    %v137 = vpop.f32.mrf.mxu0
    %v138 = vpop.f32.mrf.mxu0
    %v139 = vpop.f32.mrf.mxu0
    %140 = vdwg.mxu0
    %v141 = vmax.f32 %v136, 0.0
    %v142 = vpack.c.bf16 %v141, %v141
    %v143 = vld [vmem:[#allocation7] sm:$0xf]
    %v144 = vld [vmem:[#allocation7 + $0x4] sm:$0xf]
    %v145 = vld [vmem:[#allocation7 + $0x8] sm:$0xf]
    %v146 = vld [vmem:[#allocation7 + $0xc] sm:$0xf]
    %v147 = vld [vmem:[#allocation7 + $0x10] sm:$0xf]
    %v148 = vld [vmem:[#allocation7 + $0x14] sm:$0xf]
    %v149 = vld [vmem:[#allocation7 + $0x18] sm:$0xf]
    %v150 = vld [vmem:[#allocation7 + $0x1c] sm:$0xf]
    %v151 = vld [vmem:[#allocation7 + $0x20] sm:$0xf]
    %v152 = vld [vmem:[#allocation7 + $0x24] sm:$0xf]
    %v153 = vld [vmem:[#allocation7 + $0x28] sm:$0xf]
    %v154 = vld [vmem:[#allocation7 + $0x2c] sm:$0xf]
    %v155 = vld [vmem:[#allocation7 + $0x30] sm:$0xf]
    %v156 = vld [vmem:[#allocation7 + $0x34] sm:$0xf]
    %v157 = vld [vmem:[#allocation7 + $0x38] sm:$0xf]
    %v158 = vld [vmem:[#allocation7 + $0x3c] sm:$0xf]
    %v159 = vld [vmem:[%s5] sm:$0x1]
    %v161 = vlaneseq
    %v162 = vshrl.u32 %v161, 7
    %v163 = vsub.s32 0, %v162
    %v164 = vrot.slane %v159, %v163
    %v182 = vunpack.c.l.b16 %v143
    %v183 = vunpack.c.l.b16 %v144
    %v184 = vunpack.c.l.b16 %v145
    %v185 = vunpack.c.l.b16 %v146
    %v186 = vunpack.c.l.b16 %v147
    %v187 = vunpack.c.l.b16 %v148
    %v188 = vunpack.c.l.b16 %v149
    %v189 = vunpack.c.l.b16 %v150
    %v190 = vunpack.c.l.b16 %v151
    %v191 = vunpack.c.l.b16 %v152
    %v192 = vunpack.c.l.b16 %v153
    %v193 = vunpack.c.l.b16 %v154
    %v194 = vunpack.c.l.b16 %v155
    %v195 = vunpack.c.l.b16 %v156
    %v196 = vunpack.c.l.b16 %v157
    %v197 = vunpack.c.l.b16 %v158
    %v198 = vpack.c.b16 %v183, %v182
    %v199 = vpack.c.b16 %v185, %v184
    %v200 = vpack.c.b16 %v187, %v186
    %v201 = vpack.c.b16 %v189, %v188
    %v202 = vpack.c.b16 %v191, %v190
    %v203 = vpack.c.b16 %v193, %v192
    %v204 = vpack.c.b16 %v195, %v194
    %v205 = vpack.c.b16 %v197, %v196
    %214 = vmatprep.subr.bf16.mxu0 0
    %215 = vmatpush1.bf16.msra.mxu0 %v205
    %216 = vmatprep.subr.bf16.mxu0 0
    %217 = vmatpush1.bf16.msra.mxu0 %v204
    %218 = vmatprep.subr.bf16.mxu0 0
    %219 = vmatpush1.bf16.msra.mxu0 %v203
    %220 = vmatprep.subr.bf16.mxu0 0
    %221 = vmatpush1.bf16.msra.mxu0 %v202
    %222 = vmatprep.subr.bf16.mxu0 0
    %223 = vmatpush1.bf16.msra.mxu0 %v201
    %224 = vmatprep.subr.bf16.mxu0 0
    %225 = vmatpush1.bf16.msra.mxu0 %v200
    %226 = vmatprep.subr.bf16.mxu0 0
    %227 = vmatpush1.bf16.msra.mxu0 %v199
    %228 = vmatprep.subr.bf16.mxu0 0
    %229 = vmatpush1.bf16.msra.mxu0 %v198
    %230 = vmatprep.subr.bf16.mxu0 0
    %231 = vmatpush2.bf16.msra.mxu0 0
    %232 = vmatprep.subr.bf16.mxu0 0
    %233 = vmatpush2.bf16.msra.mxu0 0
    %234 = vmatprep.subr.bf16.mxu0 0
    %235 = vmatpush2.bf16.msra.mxu0 0
    %236 = vmatprep.subr.bf16.mxu0 0
    %237 = vmatpush2.bf16.msra.mxu0 0
    %238 = vmatprep.subr.bf16.mxu0 0
    %239 = vmatpush2.bf16.msra.mxu0 0
    %240 = vmatprep.subr.bf16.mxu0 0
    %241 = vmatpush2.bf16.msra.mxu0 0
    %242 = vmatprep.subr.bf16.mxu0 0
    %243 = vmatpush2.bf16.msra.mxu0 0
    %244 = vmatprep.subr.bf16.mxu0 0
    %245 = vmatpush2.bf16.msra.mxu0 0
    %246 = vmatprep.mubr.bf16.mxu0 0
    %247 = vmatmul.mubr.bf16.gmra.mxu0 %v142
    %v248 = vpop.f32.mrf.mxu0
    %v249 = vadd.f32 %v164, %v248
    %v250 = vpop.f32.mrf.mxu0
    %v251 = vpop.f32.mrf.mxu0
    %v252 = vpop.f32.mrf.mxu0
    %253 = vdwg.mxu0
    %v254 = vmax.f32 %v249, 0.0
    %v255 = vpack.c.bf16 %v254, %v254
    %v256 = vld [vmem:[#allocation8] sm:$0xf]
    %v257 = vld [vmem:[#allocation8 + $0x4] sm:$0xf]
    %v258 = vld [vmem:[#allocation8 + $0x8] sm:$0xf]
    %v259 = vld [vmem:[#allocation8 + $0xc] sm:$0xf]
    %v260 = vld [vmem:[#allocation8 + $0x10] sm:$0xf]
    %v261 = vld [vmem:[#allocation8 + $0x14] sm:$0xf]
    %v262 = vld [vmem:[#allocation8 + $0x18] sm:$0xf]
    %v263 = vld [vmem:[#allocation8 + $0x1c] sm:$0xf]
    %v264 = vld [vmem:[#allocation8 + $0x20] sm:$0xf]
    %v265 = vld [vmem:[#allocation8 + $0x24] sm:$0xf]
    %v266 = vld [vmem:[#allocation8 + $0x28] sm:$0xf]
    %v267 = vld [vmem:[#allocation8 + $0x2c] sm:$0xf]
    %v268 = vld [vmem:[#allocation8 + $0x30] sm:$0xf]
    %v269 = vld [vmem:[#allocation8 + $0x34] sm:$0xf]
    %v270 = vld [vmem:[#allocation8 + $0x38] sm:$0xf]
    %v271 = vld [vmem:[#allocation8 + $0x3c] sm:$0xf]
    %v272 = vld [vmem:[%s6] sm:$0x1]
    %v274 = vlaneseq
    %v275 = vshrl.u32 %v274, 7
    %v276 = vsub.s32 0, %v275
    %v277 = vrot.slane %v272, %v276
    %v295 = vunpack.c.l.b16 %v256
    %v296 = vunpack.c.l.b16 %v257
    %v297 = vunpack.c.l.b16 %v258
    %v298 = vunpack.c.l.b16 %v259
    %v299 = vunpack.c.l.b16 %v260
    %v300 = vunpack.c.l.b16 %v261
    %v301 = vunpack.c.l.b16 %v262
    %v302 = vunpack.c.l.b16 %v263
    %v303 = vunpack.c.l.b16 %v264
    %v304 = vunpack.c.l.b16 %v265
    %v305 = vunpack.c.l.b16 %v266
    %v306 = vunpack.c.l.b16 %v267
    %v307 = vunpack.c.l.b16 %v268
    %v308 = vunpack.c.l.b16 %v269
    %v309 = vunpack.c.l.b16 %v270
    %v310 = vunpack.c.l.b16 %v271
    %v311 = vpack.c.b16 %v296, %v295
    %v312 = vpack.c.b16 %v298, %v297
    %v313 = vpack.c.b16 %v300, %v299
    %v314 = vpack.c.b16 %v302, %v301
    %v315 = vpack.c.b16 %v304, %v303
    %v316 = vpack.c.b16 %v306, %v305
    %v317 = vpack.c.b16 %v308, %v307
    %v318 = vpack.c.b16 %v310, %v309
    %327 = vmatprep.subr.bf16.mxu0 0
    %328 = vmatpush1.bf16.msra.mxu0 %v318
    %329 = vmatprep.subr.bf16.mxu0 0
    %330 = vmatpush1.bf16.msra.mxu0 %v317
    %331 = vmatprep.subr.bf16.mxu0 0
    %332 = vmatpush1.bf16.msra.mxu0 %v316
    %333 = vmatprep.subr.bf16.mxu0 0
    %334 = vmatpush1.bf16.msra.mxu0 %v315
    %335 = vmatprep.subr.bf16.mxu0 0
    %336 = vmatpush1.bf16.msra.mxu0 %v314
    %337 = vmatprep.subr.bf16.mxu0 0
    %338 = vmatpush1.bf16.msra.mxu0 %v313
    %339 = vmatprep.subr.bf16.mxu0 0
    %340 = vmatpush1.bf16.msra.mxu0 %v312
    %341 = vmatprep.subr.bf16.mxu0 0
    %342 = vmatpush1.bf16.msra.mxu0 %v311
    %343 = vmatprep.subr.bf16.mxu0 0
    %344 = vmatpush2.bf16.msra.mxu0 0
    %345 = vmatprep.subr.bf16.mxu0 0
    %346 = vmatpush2.bf16.msra.mxu0 0
    %347 = vmatprep.subr.bf16.mxu0 0
    %348 = vmatpush2.bf16.msra.mxu0 0
    %349 = vmatprep.subr.bf16.mxu0 0
    %350 = vmatpush2.bf16.msra.mxu0 0
    %351 = vmatprep.subr.bf16.mxu0 0
    %352 = vmatpush2.bf16.msra.mxu0 0
    %353 = vmatprep.subr.bf16.mxu0 0
    %354 = vmatpush2.bf16.msra.mxu0 0
    %355 = vmatprep.subr.bf16.mxu0 0
    %356 = vmatpush2.bf16.msra.mxu0 0
    %357 = vmatprep.subr.bf16.mxu0 0
    %358 = vmatpush2.bf16.msra.mxu0 0
    %359 = vmatprep.mubr.bf16.mxu0 0
    %360 = vmatmul.mubr.bf16.gmra.mxu0 %v255
    %v361 = vpop.f32.mrf.mxu0
    %v362 = vadd.f32 %v277, %v361
    %v363 = vpop.f32.mrf.mxu0
    %v364 = vpop.f32.mrf.mxu0
    %v365 = vpop.f32.mrf.mxu0
    %366 = vdwg.mxu0
    %v367 = vtanh.pop %v362
    %v368 = vmul.f32 %v367, 2.0
    %369 = vst [vmem:[#allocation10] sm:$0xff] %v368
    // Predicated region
    $region46: #{tpu_custom_call.1} parent=1 // pred_check
      _
    $region47: #{tpu_custom_call.1} parent=1 // pred_check_branch
      %371 = sbr.rel (0) target = $region49
    $region48: #{tpu_custom_call.1} parent=1 // pred_region
      %s373 = ssub.s32 128, 128
      %374 = vsyncadd [#allocation4], %s373
      %s376 = sshll.u32 [#allocation10], 4
      %s377 = int_to_ptr.vmem [resolvable:$true] %s376
      %379 = dma.vmem_to_hbm [thread:$0]  %s377, 128, %s7, [#allocation4]
    $region49: #{tpu_custom_call.1} parent=1 // pred_fallthru
      _
    // Predicated region
    $region50: #{tpu_custom_call.1} parent=1 // pred_check
      _
    $region51: #{tpu_custom_call.1} parent=1 // pred_check_branch
      %381 = sbr.rel (0) target = $region53
    $region52: #{tpu_custom_call.1} parent=1 // pred_region
      %382 = dma.done [#allocation4], 128
    $region53: #{tpu_custom_call.1} parent=1 // pred_fallthru
      _
    %383 = vsyncpa [#allocation3], 1
    %384 = vsyncpa [#allocation6], 1
    %385 = vsyncpa [#allocation9], 1
    %386 = vsyncpa [#allocation4], 1

</llo_original>
